<compile_context>
chip_gen: v7x
topology: tpu7x:2x2x1
jax: 0.10.0
libtpu: 0.0.40
codegen_flags: <defaults>
</compile_context>

<pallas_src>
import functools

import jax
import jax.numpy as jnp
from jax import lax
from jax.experimental import pallas as pl
from jax.experimental.pallas import tpu as pltpu

INPUT_DIM = 16
QUERY_DIM = 32
VALUE_DIM = 32
SCALE = 1.0 / (QUERY_DIM ** 0.5)


def _kv_proj_kernel(y_ref, wk_ref, bk_ref, wv_ref, bv_ref, k_ref, v_ref):
    """One-shot K/V projection over y — runs once, NOT per query tile."""
    y = y_ref[...]                                        # [tm, D_in] bf16
    k = jnp.dot(y, wk_ref[...], preferred_element_type=jnp.float32) + bk_ref[...]
    v = jnp.dot(y, wv_ref[...], preferred_element_type=jnp.float32) + bv_ref[...]
    k_ref[...] = k.astype(jnp.bfloat16)
    v_ref[...] = v.astype(jnp.bfloat16)


def _attention_kernel(x_ref, wq_ref, bq_ref, k_ref, v_ref, o_ref, *, exp_dtype):
    x = x_ref[...]                                        # [tn, D_in] bf16

    # Q projection (bf16 MXU, f32 accumulate); fold the 1/sqrt(Dq) scale into the
    # small [tn, Dq] q tensor instead of scaling the [tn, M] scores.
    q = jnp.dot(x, wq_ref[...], preferred_element_type=jnp.float32) + bq_ref[...]
    q = (q * SCALE).astype(jnp.bfloat16)

    # scores = q_scaled @ K^T — contract last dims, no transpose materialized.
    s = lax.dot_general(q, k_ref[...],
                        dimension_numbers=(((1,), (1,)), ((), ())),
                        preferred_element_type=jnp.float32)          # [tn, M] f32

    # Numerically-stable softmax with DEFERRED normalization: the probability
    # matrix is never normalized; instead the [tn, Dv] output is scaled.
    s = s - jnp.max(s, axis=-1, keepdims=True)
    p = jnp.exp(s.astype(exp_dtype))            # bf16 exp on v6e/v7x, f32 on v5e
    denom = jnp.sum(p.astype(jnp.float32), axis=-1, keepdims=True)   # f32 row sum

    o = jnp.dot(p.astype(jnp.bfloat16), v_ref[...],
                preferred_element_type=jnp.float32)                  # [tn, Dv] f32
    # approx reciprocal (EUP slot, nearly free); rows sum to 1 +/- ~1e-3 relative.
    o_ref[...] = o * pl.reciprocal(denom, approx=True)


def _device_config():
    kind = jax.devices()[0].device_kind.lower()
    is_v5 = "v5" in kind
    is_v7 = ("v7" in kind) or ("tpu7" in kind) or ("7x" in kind)
    exp_dtype = jnp.float32 if is_v5 else jnp.bfloat16    # v5e has no bf16 EUP/VPU
    if is_v7:
        vmem_limit = 32 * 1024 * 1024      # v7x: 64 MiB physical VMEM -> stay low
        score_budget = 16 * 1024 * 1024    # budget for [tn, M] intermediates
        max_tn = 512
    else:
        vmem_limit = 96 * 1024 * 1024      # v5e/v6e: 128 MiB physical VMEM
        score_budget = 48 * 1024 * 1024
        max_tn = 1024
    return exp_dtype, vmem_limit, score_budget, max_tn


def _pick_query_tile(N, M, score_budget, max_tn):
    # Per query row: [M] f32 scores + [M] probs (+ slack for q/o/x/bias tiles).
    per_row = M * 8 + 2048
    tn = max(8, min(max_tn, score_budget // per_row))
    tn -= tn % 8                          # keep sublane-aligned tiles
    if tn >= N:
        tn = N                            # single full-extent block
    return int(tn)


def attention_pallas(x, y, wq, bq, wk, bk, wv, bv, *, block_n=None):
    N, _ = x.shape
    M, _ = y.shape
    exp_dtype, vmem_limit, score_budget, max_tn = _device_config()

    # bf16 MXU operands; biases stay f32 (added after f32 accumulation).
    x_bf = x.astype(jnp.bfloat16)
    y_bf = y.astype(jnp.bfloat16)
    wq_bf = wq.astype(jnp.bfloat16)
    wk_bf = wk.astype(jnp.bfloat16)
    wv_bf = wv.astype(jnp.bfloat16)

    # ---- K/V projection: hoisted, runs once over y ----------------------------
    tm = M if M <= 1024 else 1024
    proj_cost = pl.CostEstimate(
        flops=2 * M * INPUT_DIM * (QUERY_DIM + VALUE_DIM),
        transcendentals=0,
        bytes_accessed=(y_bf.size * 2 + wk_bf.size * 2 + wv_bf.size * 2
                        + bk.size * 4 + bv.size * 4
                        + M * (QUERY_DIM + VALUE_DIM) * 2))
    k_bf, v_bf = pl.pallas_call(
        _kv_proj_kernel,
        out_shape=(jax.ShapeDtypeStruct((M, QUERY_DIM), jnp.bfloat16),
                   jax.ShapeDtypeStruct((M, VALUE_DIM), jnp.bfloat16)),
        grid_spec=pltpu.PrefetchScalarGridSpec(
            num_scalar_prefetch=0,
            grid=(pl.cdiv(M, tm),),
            in_specs=[
                pl.BlockSpec((tm, INPUT_DIM), lambda i: (i, 0)),        # y tile
                pl.BlockSpec((INPUT_DIM, QUERY_DIM), lambda i: (0, 0)), # wk
                pl.BlockSpec((1, QUERY_DIM), lambda i: (0, 0)),         # bk
                pl.BlockSpec((INPUT_DIM, VALUE_DIM), lambda i: (0, 0)), # wv
                pl.BlockSpec((1, VALUE_DIM), lambda i: (0, 0)),         # bv
            ],
            out_specs=[
                pl.BlockSpec((tm, QUERY_DIM), lambda i: (i, 0)),
                pl.BlockSpec((tm, VALUE_DIM), lambda i: (i, 0)),
            ],
        ),
        compiler_params=pltpu.CompilerParams(
            dimension_semantics=("parallel",),
            vmem_limit_bytes=vmem_limit),
        cost_estimate=proj_cost,
    )(y_bf, wk_bf, bk, wv_bf, bv)

    # ---- attention over query-row tiles with resident bf16 K/V ----------------
    if block_n is None:
        tn = _pick_query_tile(N, M, score_budget, max_tn)
    else:
        tn = min(block_n, N)
    grid = (pl.cdiv(N, tn),)

    attn_cost = pl.CostEstimate(
        flops=2 * (N * INPUT_DIM * QUERY_DIM        # Q projection
                   + N * M * QUERY_DIM              # scores
                   + N * M * VALUE_DIM),            # p @ V
        transcendentals=N * M,
        bytes_accessed=(x_bf.size * 2 + wq_bf.size * 2 + bq.size * 4
                        + M * (QUERY_DIM + VALUE_DIM) * 2
                        + N * VALUE_DIM * 4))

    kernel = functools.partial(_attention_kernel, exp_dtype=exp_dtype)
    return pl.pallas_call(
        kernel,
        out_shape=jax.ShapeDtypeStruct((N, VALUE_DIM), jnp.float32),
        grid_spec=pltpu.PrefetchScalarGridSpec(
            num_scalar_prefetch=0,
            grid=grid,
            in_specs=[
                pl.BlockSpec((tn, INPUT_DIM), lambda i: (i, 0)),        # x tile
                pl.BlockSpec((INPUT_DIM, QUERY_DIM), lambda i: (0, 0)), # wq
                pl.BlockSpec((1, QUERY_DIM), lambda i: (0, 0)),         # bq
                pl.BlockSpec((M, QUERY_DIM), lambda i: (0, 0)),         # K (resident)
                pl.BlockSpec((M, VALUE_DIM), lambda i: (0, 0)),         # V (resident)
            ],
            out_specs=pl.BlockSpec((tn, VALUE_DIM), lambda i: (i, 0)),
        ),
        compiler_params=pltpu.CompilerParams(
            dimension_semantics=("parallel",),   # megacore-safe: no cross-step state
            vmem_limit_bytes=vmem_limit),
        cost_estimate=attn_cost,
    )(x_bf, wq_bf, bq, k_bf, v_bf)


def init_linear_params(key, in_dim, out_dim):
    """Deterministic init mimicking PyTorch nn.Linear default (uniform +/-1/sqrt(in))."""
    kw, kb = jax.random.split(key)
    bound = 1.0 / (in_dim ** 0.5)
    # Stored as [in, out] so kernels compute x @ W (== x @ W_pt.T).
    w = jax.random.uniform(kw, (in_dim, out_dim), jnp.float32, -bound, bound)
    b = jax.random.uniform(kb, (1, out_dim), jnp.float32, -bound, bound)
    return w, b


def reference(x, y, wq, bq, wk, bk, wv, bv):
    q = x @ wq + bq
    k = y @ wk + bk
    v = y @ wv + bv
    s = (q @ k.T) / (QUERY_DIM ** 0.5)
    p = jax.nn.softmax(s, axis=-1)
    return p @ v


if __name__ == "__main__":
    key = jax.random.PRNGKey(0)
    kx, ky, kq, kk, kv = jax.random.split(key, 5)

    N, M = 8, 8
    x = jax.random.normal(kx, (N, INPUT_DIM), jnp.float32)
    y = jax.random.normal(ky, (M, INPUT_DIM), jnp.float32)

    wq, bq = init_linear_params(kq, INPUT_DIM, QUERY_DIM)
    wk, bk = init_linear_params(kk, INPUT_DIM, QUERY_DIM)
    wv, bv = init_linear_params(kv, INPUT_DIM, VALUE_DIM)

    out = attention_pallas(x, y, wq, bq, wk, bk, wv, bv)
    out = jax.block_until_ready(out)

    ref = reference(x, y, wq, bq, wk, bk, wv, bv)
    assert out.shape == (N, VALUE_DIM)
    # bf16 MXU operands (+ bf16 exp on v6e/v7x) + approx reciprocal -> loose tolerance.
    assert jnp.allclose(out, ref, atol=2e-2, rtol=2e-2), "mismatch vs reference"

    print("KERNEL_OK")
</pallas_src>

<mosaic_0001>
module attributes {stable_mosaic.version = 11 : i64} {
  func.func @_kv_proj_kernel(%arg0: i32, %arg1: memref<8x16xbf16, #tpu.memory_space<vmem>>, %arg2: memref<16x32xbf16, #tpu.memory_space<vmem>>, %arg3: memref<1x32xf32, #tpu.memory_space<vmem>>, %arg4: memref<16x32xbf16, #tpu.memory_space<vmem>>, %arg5: memref<1x32xf32, #tpu.memory_space<vmem>>, %arg6: memref<8x32xbf16, #tpu.memory_space<vmem>>, %arg7: memref<8x32xbf16, #tpu.memory_space<vmem>>) attributes {dimension_semantics = [#tpu.dimension_semantics<parallel>], iteration_bounds = array<i64: 1>, scalar_prefetch = 0 : i64, scratch_operands = 0 : i64, tpu.core_type = #tpu.core_type<tc>, window_params = [{transform_indices = @transform_0, window_bounds = array<i64: 8, 16>}, {pipeline_mode = #tpu.pipeline_mode<synchronous>, transform_indices = @transform_1, window_bounds = array<i64: 16, 32>}, {pipeline_mode = #tpu.pipeline_mode<synchronous>, transform_indices = @transform_2, window_bounds = array<i64: 1, 32>}, {pipeline_mode = #tpu.pipeline_mode<synchronous>, transform_indices = @transform_3, window_bounds = array<i64: 16, 32>}, {pipeline_mode = #tpu.pipeline_mode<synchronous>, transform_indices = @transform_4, window_bounds = array<i64: 1, 32>}, {transform_indices = @transform_5, window_bounds = array<i64: 8, 32>}, {transform_indices = @transform_6, window_bounds = array<i64: 8, 32>}]} {
    %c0 = arith.constant 0 : index
    %c0_0 = arith.constant 0 : index
    %0 = vector.load %arg1[%c0, %c0_0] : memref<8x16xbf16, #tpu.memory_space<vmem>>, vector<8x16xbf16>
    %c0_1 = arith.constant 0 : index
    %c0_2 = arith.constant 0 : index
    %1 = vector.load %arg2[%c0_1, %c0_2] : memref<16x32xbf16, #tpu.memory_space<vmem>>, vector<16x32xbf16>
    %cst = arith.constant dense<0.000000e+00> : vector<8x32xf32>
    %2 = tpu.matmul %0, %1, %cst {dimension_numbers = #tpu.dot_dimension_numbers<[1], [0], [0], [1], [0, 0, 1, 1], [], []>} : vector<8x16xbf16>, vector<16x32xbf16>, vector<8x32xf32> -> vector<8x32xf32>
    %c0_3 = arith.constant 0 : index
    %c0_4 = arith.constant 0 : index
    %3 = vector.load %arg3[%c0_3, %c0_4] : memref<1x32xf32, #tpu.memory_space<vmem>>, vector<1x32xf32>
    %4 = vector.broadcast %3 : vector<1x32xf32> to vector<8x32xf32>
    %5 = arith.addf %2, %4 : vector<8x32xf32>
    %c0_5 = arith.constant 0 : index
    %c0_6 = arith.constant 0 : index
    %6 = vector.load %arg4[%c0_5, %c0_6] : memref<16x32xbf16, #tpu.memory_space<vmem>>, vector<16x32xbf16>
    %cst_7 = arith.constant dense<0.000000e+00> : vector<8x32xf32>
    %7 = tpu.matmul %0, %6, %cst_7 {dimension_numbers = #tpu.dot_dimension_numbers<[1], [0], [0], [1], [0, 0, 1, 1], [], []>} : vector<8x16xbf16>, vector<16x32xbf16>, vector<8x32xf32> -> vector<8x32xf32>
    %c0_8 = arith.constant 0 : index
    %c0_9 = arith.constant 0 : index
    %8 = vector.load %arg5[%c0_8, %c0_9] : memref<1x32xf32, #tpu.memory_space<vmem>>, vector<1x32xf32>
    %9 = vector.broadcast %8 : vector<1x32xf32> to vector<8x32xf32>
    %10 = arith.addf %7, %9 : vector<8x32xf32>
    %11 = arith.truncf %5 : vector<8x32xf32> to vector<8x32xbf16>
    %c0_10 = arith.constant 0 : index
    %c0_11 = arith.constant 0 : index
    %12 = vector.load %arg6[%c0_10, %c0_11] : memref<8x32xbf16, #tpu.memory_space<vmem>>, vector<8x32xbf16>
    tpu.vector_store %arg6[%c0_10, %c0_11], %11 {strides = array<i32>} : memref<8x32xbf16, #tpu.memory_space<vmem>>, vector<8x32xbf16>,
    %13 = arith.truncf %10 : vector<8x32xf32> to vector<8x32xbf16>
    %c0_12 = arith.constant 0 : index
    %c0_13 = arith.constant 0 : index
    %14 = vector.load %arg7[%c0_12, %c0_13] : memref<8x32xbf16, #tpu.memory_space<vmem>>, vector<8x32xbf16>
    tpu.vector_store %arg7[%c0_12, %c0_13], %13 {strides = array<i32>} : memref<8x32xbf16, #tpu.memory_space<vmem>>, vector<8x32xbf16>,
    return
  }
  func.func @transform_0(%arg0: i32) -> (i32, i32) {
    %c0_i32 = arith.constant 0 : i32
    %c0_i32_0 = arith.constant 0 : i32
    return %arg0, %c0_i32 : i32, i32
  }
  func.func @transform_1(%arg0: i32) -> (i32, i32) {
    %c0_i32 = arith.constant 0 : i32
    %c0_i32_0 = arith.constant 0 : i32
    %c0_i32_1 = arith.constant 0 : i32
    return %c0_i32, %c0_i32_0 : i32, i32
  }
  func.func @transform_2(%arg0: i32) -> (i32, i32) {
    %c0_i32 = arith.constant 0 : i32
    %c0_i32_0 = arith.constant 0 : i32
    %c0_i32_1 = arith.constant 0 : i32
    return %c0_i32, %c0_i32_0 : i32, i32
  }
  func.func @transform_3(%arg0: i32) -> (i32, i32) {
    %c0_i32 = arith.constant 0 : i32
    %c0_i32_0 = arith.constant 0 : i32
    %c0_i32_1 = arith.constant 0 : i32
    return %c0_i32, %c0_i32_0 : i32, i32
  }
  func.func @transform_4(%arg0: i32) -> (i32, i32) {
    %c0_i32 = arith.constant 0 : i32
    %c0_i32_0 = arith.constant 0 : i32
    %c0_i32_1 = arith.constant 0 : i32
    return %c0_i32, %c0_i32_0 : i32, i32
  }
  func.func @transform_5(%arg0: i32) -> (i32, i32) {
    %c0_i32 = arith.constant 0 : i32
    %c0_i32_0 = arith.constant 0 : i32
    return %arg0, %c0_i32 : i32, i32
  }
  func.func @transform_6(%arg0: i32) -> (i32, i32) {
    %c0_i32 = arith.constant 0 : i32
    %c0_i32_0 = arith.constant 0 : i32
    return %arg0, %c0_i32 : i32, i32
  }
}

</mosaic_0001>

<llo_original>
// kernel: tpu_custom_call.1
$region0: #{tpu_custom_call.1}
  #allocation0 [shape = 'u32[]', space=smem, size = 0x4, offset = 0x4, fixed_abs, tag = 'smem constant byte address 0x4 - core index']
  #allocation1 [shape = 'u32[144,128]{1,0:T(1,128)}', space=vmem, size = 0x12000, scoped, tag = 'internal scratch']
  %s0 = inlined_call_operand.hbm [shape: bf16[8,16], index: 0, kind: input, shape index: {}]
  %s1 = inlined_call_operand.hbm [shape: bf16[16,32], index: 1, kind: input, shape index: {}]
  %s2 = inlined_call_operand.hbm [shape: f32[1,32], index: 2, kind: input, shape index: {}]
  %s3 = inlined_call_operand.hbm [shape: bf16[16,32], index: 3, kind: input, shape index: {}]
  %s4 = inlined_call_operand.hbm [shape: f32[1,32], index: 4, kind: input, shape index: {}]
  %s5 = inlined_call_operand.hbm [shape: bf16[8,32], index: 5, kind: output, shape index: {0}]
  %s6 = inlined_call_operand.hbm [shape: bf16[8,32], index: 6, kind: output, shape index: {1}]
  %7 = xla_tuple %s5, %s6
  %s8 = sld [smem:[#allocation0]]
  $region58: #{tpu_custom_call.1} parent=0
    _
  %s10 = ssub.s32 1, %s8
  %s11 = scalar_select 0, %s10, %s8
  $region1: #{tpu_custom_call.1} parent=0
    #allocation2 [shape = 'u8[2048]{0}', space=vmem, size = 0x800, scoped, tag = 'input window, operand 0, single buffered']
    #allocation3 [shape = 's32[1]{0}', space=sflag, size = 0x4, scoped, tag = 'scoped memory for tpu_custom_call.1']
    #allocation4 [shape = 's32[1]{0}', space=sflag, size = 0x4, scoped, tag = 'scoped memory for tpu_custom_call.1']
    #allocation5 [shape = 'u8[4096]{0}', space=vmem, size = 0x1000, scoped, tag = 'input window, operand 1, single buffered']
    #allocation6 [shape = 's32[1]{0}', space=sflag, size = 0x4, scoped, tag = 'scoped memory for tpu_custom_call.1']
    #allocation7 [shape = 'u8[512]{0}', space=vmem, size = 0x400, scoped, tag = 'input window, operand 2, single buffered']
    #allocation8 [shape = 'u8[4096]{0}', space=vmem, size = 0x1000, scoped, tag = 'input window, operand 3, single buffered']
    #allocation9 [shape = 's32[1]{0}', space=sflag, size = 0x4, scoped, tag = 'scoped memory for tpu_custom_call.1']
    #allocation10 [shape = 'u8[512]{0}', space=vmem, size = 0x400, scoped, tag = 'input window, operand 4, single buffered']
    #allocation11 [shape = 'u8[2048]{0}', space=vmem, size = 0x800, scoped, tag = 'output window, operand 0, single buffered']
    #allocation12 [shape = 'u8[2048]{0}', space=vmem, size = 0x800, scoped, tag = 'output window, operand 1, single buffered']
    #allocation13 [shape = 's32[1]{0}', space=sflag, size = 0x4, scoped, tag = 'scoped memory for tpu_custom_call.1']
    %12 = vsyncpa [#allocation3], 0
    %13 = vsyncpa [#allocation6], 0
    %14 = vsyncpa [#allocation9], 0
    %15 = vsyncpa [#allocation4], 0
    %16 = vsyncpa [#allocation13], 0
    // Predicated region
    $region2: #{tpu_custom_call.1} parent=1 // pred_check
      _
    $region3: #{tpu_custom_call.1} parent=1 // pred_check_branch
      %18 = sbr.rel (0) target = $region5
    $region4: #{tpu_custom_call.1} parent=1 // pred_region
      %s20 = ssub.s32 64, 64
      %21 = vsyncadd [#allocation3], %s20
      %s23 = sshll.u32 [#allocation2], 4
      %s24 = int_to_ptr.vmem [resolvable:$true] %s23
      %26 = dma.hbm_to_vmem [thread:$0]  %s0, 64, %s24, [#allocation3]
    $region5: #{tpu_custom_call.1} parent=1 // pred_fallthru
      _
    // Predicated region
    $region6: #{tpu_custom_call.1} parent=1 // pred_check
      _
    $region7: #{tpu_custom_call.1} parent=1 // pred_check_branch
      %28 = sbr.rel (0) target = $region9
    $region8: #{tpu_custom_call.1} parent=1 // pred_region
      %s30 = ssub.s32 128, 128
      %31 = vsyncadd [#allocation6], %s30
      %s32 = sshll.u32 [#allocation5], 4
      %s33 = int_to_ptr.vmem [resolvable:$true] %s32
      %38 = dma.hbm_to_vmem [thread:$0]  %s1, 128, %s33, [#allocation6], 64, 64, 4
    $region9: #{tpu_custom_call.1} parent=1 // pred_fallthru
      _
    // Predicated region
    $region10: #{tpu_custom_call.1} parent=1 // pred_check
      _
    $region11: #{tpu_custom_call.1} parent=1 // pred_check_branch
      %40 = sbr.rel (0) target = $region13
    $region12: #{tpu_custom_call.1} parent=1 // pred_region
      %s42 = ssub.s32 16, 16
      %43 = vsyncadd [#allocation6], %s42
      %s45 = sshll.u32 [#allocation7], 4
      %s46 = int_to_ptr.vmem [resolvable:$true] %s45
      %48 = dma.hbm_to_vmem [thread:$0]  %s2, 16, %s46, [#allocation6]
    $region13: #{tpu_custom_call.1} parent=1 // pred_fallthru
      _
    // Predicated region
    $region14: #{tpu_custom_call.1} parent=1 // pred_check
      _
    $region15: #{tpu_custom_call.1} parent=1 // pred_check_branch
      %50 = sbr.rel (0) target = $region17
    $region16: #{tpu_custom_call.1} parent=1 // pred_region
      %s52 = ssub.s32 128, 128
      %53 = vsyncadd [#allocation9], %s52
      %s54 = sshll.u32 [#allocation8], 4
      %s55 = int_to_ptr.vmem [resolvable:$true] %s54
      %60 = dma.hbm_to_vmem [thread:$0]  %s3, 128, %s55, [#allocation9], 64, 64, 4
    $region17: #{tpu_custom_call.1} parent=1 // pred_fallthru
      _
    // Predicated region
    $region18: #{tpu_custom_call.1} parent=1 // pred_check
      _
    $region19: #{tpu_custom_call.1} parent=1 // pred_check_branch
      %62 = sbr.rel (0) target = $region21
    $region20: #{tpu_custom_call.1} parent=1 // pred_region
      %s64 = ssub.s32 16, 16
      %65 = vsyncadd [#allocation9], %s64
      %s67 = sshll.u32 [#allocation10], 4
      %s68 = int_to_ptr.vmem [resolvable:$true] %s67
      %70 = dma.hbm_to_vmem [thread:$0]  %s4, 16, %s68, [#allocation9]
    $region21: #{tpu_custom_call.1} parent=1 // pred_fallthru
      _
    // Predicated region
    $region22: #{tpu_custom_call.1} parent=1 // pred_check
      _
    $region23: #{tpu_custom_call.1} parent=1 // pred_check_branch
      %72 = sbr.rel (0) target = $region25
    $region24: #{tpu_custom_call.1} parent=1 // pred_region
      %73 = dma.done [#allocation3], 64
    $region25: #{tpu_custom_call.1} parent=1 // pred_fallthru
      _
    // Predicated region
    $region26: #{tpu_custom_call.1} parent=1 // pred_check
      _
    $region27: #{tpu_custom_call.1} parent=1 // pred_check_branch
      %75 = sbr.rel (0) target = $region29
    $region28: #{tpu_custom_call.1} parent=1 // pred_region
      %76 = dma.done [#allocation6], 128
    $region29: #{tpu_custom_call.1} parent=1 // pred_fallthru
      _
    // Predicated region
    $region30: #{tpu_custom_call.1} parent=1 // pred_check
      _
    $region31: #{tpu_custom_call.1} parent=1 // pred_check_branch
      %78 = sbr.rel (0) target = $region33
    $region32: #{tpu_custom_call.1} parent=1 // pred_region
      %79 = dma.done [#allocation6], 16
    $region33: #{tpu_custom_call.1} parent=1 // pred_fallthru
      _
    // Predicated region
    $region34: #{tpu_custom_call.1} parent=1 // pred_check
      _
    $region35: #{tpu_custom_call.1} parent=1 // pred_check_branch
      %81 = sbr.rel (0) target = $region37
    $region36: #{tpu_custom_call.1} parent=1 // pred_region
      %82 = dma.done [#allocation9], 128
    $region37: #{tpu_custom_call.1} parent=1 // pred_fallthru
      _
    // Predicated region
    $region38: #{tpu_custom_call.1} parent=1 // pred_check
      _
    $region39: #{tpu_custom_call.1} parent=1 // pred_check_branch
      %84 = sbr.rel (0) target = $region41
    $region40: #{tpu_custom_call.1} parent=1 // pred_region
      %85 = dma.done [#allocation9], 16
    $region41: #{tpu_custom_call.1} parent=1 // pred_fallthru
      _
    %v87 = vld [vmem:[#allocation2] sm:$0xf]
    %v88 = vld [vmem:[#allocation5] sm:$0xf]
    %v89 = vld [vmem:[#allocation5 + $0x4] sm:$0xf]
    %v90 = vld [vmem:[#allocation7] sm:$0x1]
    %v92 = vlaneseq
    %v93 = vshrl.u32 %v92, 7
    %v94 = vsub.s32 0, %v93
    %v95 = vrot.slane %v90, %v94
    %v99 = vunpack.c.l.b16 %v88
    %v100 = vunpack.c.l.b16 %v89
    %v101 = vpack.c.b16 %v100, %v99
    %vm103 = vcmask 130048
    %v105 = vsel %vm103, %v87, 0
    %107 = vmatprep.subr.bf16.mxu0 0
    %108 = vmatpush1.bf16.msra.mxu0 %v101
    %109 = vmatprep.subr.bf16.mxu0 0
    %110 = vmatpush1.bf16.msra.mxu0 0
    %111 = vmatprep.subr.bf16.mxu0 0
    %112 = vmatpush1.bf16.msra.mxu0 0
    %113 = vmatprep.subr.bf16.mxu0 0
    %114 = vmatpush1.bf16.msra.mxu0 0
    %115 = vmatprep.subr.bf16.mxu0 0
    %116 = vmatpush1.bf16.msra.mxu0 0
    %117 = vmatprep.subr.bf16.mxu0 0
    %118 = vmatpush1.bf16.msra.mxu0 0
    %119 = vmatprep.subr.bf16.mxu0 0
    %120 = vmatpush1.bf16.msra.mxu0 0
    %121 = vmatprep.subr.bf16.mxu0 0
    %122 = vmatpush1.bf16.msra.mxu0 0
    %123 = vmatprep.subr.bf16.mxu0 0
    %124 = vmatpush1.bf16.msra.mxu0 0
    %125 = vmatprep.subr.bf16.mxu0 0
    %126 = vmatpush1.bf16.msra.mxu0 0
    %127 = vmatprep.subr.bf16.mxu0 0
    %128 = vmatpush1.bf16.msra.mxu0 0
    %129 = vmatprep.subr.bf16.mxu0 0
    %130 = vmatpush1.bf16.msra.mxu0 0
    %131 = vmatprep.subr.bf16.mxu0 0
    %132 = vmatpush1.bf16.msra.mxu0 0
    %133 = vmatprep.subr.bf16.mxu0 0
    %134 = vmatpush1.bf16.msra.mxu0 0
    %135 = vmatprep.subr.bf16.mxu0 0
    %136 = vmatpush1.bf16.msra.mxu0 0
    %137 = vmatprep.subr.bf16.mxu0 0
    %138 = vmatpush1.bf16.msra.mxu0 0
    %139 = vmatprep.mubr.bf16.mxu0 0
    %140 = vmatmul.mubr.bf16.gmra.mrb[0].mxu0 %v105
    %v141 = vpop.f32.mrb[0].mxu0
    %v142 = vadd.f32 %v95, %v141
    %v143 = vpop.f32.mrb[0].mxu0
    %v144 = vpop.f32.mrb[0].mxu0
    %v145 = vpop.f32.mrb[0].mxu0
    %146 = vdwg.mxu0
    %v147 = vld [vmem:[#allocation8] sm:$0xf]
    %v148 = vld [vmem:[#allocation8 + $0x4] sm:$0xf]
    %v149 = vld [vmem:[#allocation10] sm:$0x1]
    %v151 = vlaneseq
    %v152 = vshrl.u32 %v151, 7
    %v153 = vsub.s32 0, %v152
    %v154 = vrot.slane %v149, %v153
    %v158 = vunpack.c.l.b16 %v147
    %v159 = vunpack.c.l.b16 %v148
    %v160 = vpack.c.b16 %v159, %v158
    %162 = vmatprep.subr.bf16.mxu0 0
    %163 = vmatpush1.bf16.msra.mxu0 %v160
    %164 = vmatprep.subr.bf16.mxu0 0
    %165 = vmatpush1.bf16.msra.mxu0 0
    %166 = vmatprep.subr.bf16.mxu0 0
    %167 = vmatpush1.bf16.msra.mxu0 0
    %168 = vmatprep.subr.bf16.mxu0 0
    %169 = vmatpush1.bf16.msra.mxu0 0
    %170 = vmatprep.subr.bf16.mxu0 0
    %171 = vmatpush1.bf16.msra.mxu0 0
    %172 = vmatprep.subr.bf16.mxu0 0
    %173 = vmatpush1.bf16.msra.mxu0 0
    %174 = vmatprep.subr.bf16.mxu0 0
    %175 = vmatpush1.bf16.msra.mxu0 0
    %176 = vmatprep.subr.bf16.mxu0 0
    %177 = vmatpush1.bf16.msra.mxu0 0
    %178 = vmatprep.subr.bf16.mxu0 0
    %179 = vmatpush1.bf16.msra.mxu0 0
    %180 = vmatprep.subr.bf16.mxu0 0
    %181 = vmatpush1.bf16.msra.mxu0 0
    %182 = vmatprep.subr.bf16.mxu0 0
    %183 = vmatpush1.bf16.msra.mxu0 0
    %184 = vmatprep.subr.bf16.mxu0 0
    %185 = vmatpush1.bf16.msra.mxu0 0
    %186 = vmatprep.subr.bf16.mxu0 0
    %187 = vmatpush1.bf16.msra.mxu0 0
    %188 = vmatprep.subr.bf16.mxu0 0
    %189 = vmatpush1.bf16.msra.mxu0 0
    %190 = vmatprep.subr.bf16.mxu0 0
    %191 = vmatpush1.bf16.msra.mxu0 0
    %192 = vmatprep.subr.bf16.mxu0 0
    %193 = vmatpush1.bf16.msra.mxu0 0
    %194 = vmatprep.mubr.bf16.mxu0 0
    %195 = vmatmul.mubr.bf16.gmra.mrb[0].mxu0 %v105
    %v196 = vpop.f32.mrb[0].mxu0
    %v197 = vadd.f32 %v154, %v196
    %v198 = vpop.f32.mrb[0].mxu0
    %v199 = vpop.f32.mrb[0].mxu0
    %v200 = vpop.f32.mrb[0].mxu0
    %201 = vdwg.mxu0
    %v202 = vpack.c.bf16 %v142, %v142
    %vm203 = vcmask 257024
    %204 = vst.msk [vmem:[#allocation11] sm:$0xf] %vm203, %v202
    %v205 = vpack.c.bf16 %v197, %v197
    %206 = vst.msk [vmem:[#allocation12] sm:$0xf] %vm203, %v205
    // Predicated region
    $region42: #{tpu_custom_call.1} parent=1 // pred_check
      _
    $region43: #{tpu_custom_call.1} parent=1 // pred_check_branch
      %208 = sbr.rel (0) target = $region45
    $region44: #{tpu_custom_call.1} parent=1 // pred_region
      %s210 = ssub.s32 64, 64
      %211 = vsyncadd [#allocation4], %s210
      %s213 = sshll.u32 [#allocation11], 4
      %s214 = int_to_ptr.vmem [resolvable:$true] %s213
      %216 = dma.vmem_to_hbm [thread:$0]  %s214, 64, %s5, [#allocation4]
    $region45: #{tpu_custom_call.1} parent=1 // pred_fallthru
      _
    // Predicated region
    $region46: #{tpu_custom_call.1} parent=1 // pred_check
      _
    $region47: #{tpu_custom_call.1} parent=1 // pred_check_branch
      %218 = sbr.rel (0) target = $region49
    $region48: #{tpu_custom_call.1} parent=1 // pred_region
      %s220 = ssub.s32 64, 64
      %221 = vsyncadd [#allocation13], %s220
      %s223 = sshll.u32 [#allocation12], 4
      %s224 = int_to_ptr.vmem [resolvable:$true] %s223
      %226 = dma.vmem_to_hbm [thread:$0]  %s224, 64, %s6, [#allocation13]
    $region49: #{tpu_custom_call.1} parent=1 // pred_fallthru
      _
    // Predicated region
    $region50: #{tpu_custom_call.1} parent=1 // pred_check
      _
    $region51: #{tpu_custom_call.1} parent=1 // pred_check_branch
      %228 = sbr.rel (0) target = $region53
    $region52: #{tpu_custom_call.1} parent=1 // pred_region
      %229 = dma.done [#allocation4], 64
    $region53: #{tpu_custom_call.1} parent=1 // pred_fallthru
      _
    // Predicated region
    $region54: #{tpu_custom_call.1} parent=1 // pred_check
      _
    $region55: #{tpu_custom_call.1} parent=1 // pred_check_branch
      %231 = sbr.rel (0) target = $region57
    $region56: #{tpu_custom_call.1} parent=1 // pred_region
      %232 = dma.done [#allocation13], 64
    $region57: #{tpu_custom_call.1} parent=1 // pred_fallthru
      _
    %233 = vsyncpa [#allocation3], 1
    %234 = vsyncpa [#allocation6], 1
    %235 = vsyncpa [#allocation9], 1
    %236 = vsyncpa [#allocation4], 1
    %237 = vsyncpa [#allocation13], 1

</llo_original>
